<compile_context>
chip_gen: v6e
topology: v6e:2x2x1
jax: 0.10.0
libtpu: 0.0.40
codegen_flags: <defaults>
</compile_context>

<pallas_src>
import functools
import math

import jax
import jax.numpy as jnp
from jax.experimental import pallas as pl
from jax.experimental.pallas import tpu as pltpu


_LANES = 128
_MAX_BLOCK_ROWS_PACKED = 8192                 # 8192*128*4B = 4 MiB out block
_OUT_BLOCK_BYTES_BUDGET = 4 * 1024 * 1024     # simple-path out-block budget
_MAX_BLOCK_BATCH = 8192
_VMEM_LIMIT = 32 * 1024 * 1024                # safe scoped limit on v5e/v6e/v7x


def _pick_block_rows(total_rows: int, max_rows: int) -> int:
    """Block row count: multiple of 8 (sublane) or the full extent.

    Prefers >= 2 grid steps so ("parallel",) can shard across v7x's 2 TCs.
    """
    max_rows = max(8, (max_rows // 8) * 8)
    if total_rows <= 8:
        return total_rows                        # tiny: single full-extent block
    half = -(-total_rows // 2)                   # cdiv(total_rows, 2)
    tb = min(max_rows, ((half + 7) // 8) * 8)    # round up to a multiple of 8
    if tb >= total_rows:
        return total_rows                        # cannot split cleanly
    return tb


def _freq_phase_tables(dim: int):
    half = dim // 2
    scale = math.log(10000.0) / (half - 1)       # dim >= 4 guarantees half-1 >= 1
    freqs = jnp.exp(jnp.arange(half, dtype=jnp.float32) * (-scale))
    freqs_full = jnp.concatenate([freqs, freqs])                       # (dim,)
    phase = jnp.concatenate(
        [jnp.zeros((half,), jnp.float32),
         jnp.full((half,), jnp.float32(math.pi / 2.0))])               # (dim,)
    return freqs_full, phase


# ----------------------------- kernels ------------------------------------- #

def _time_embedding_packed_kernel(t_ref, e_ref, out_ref):
    """Lane-dense path.

    t_ref  : (TB, pack+1)  f32  [times for this 128-lane row | 1.0]
    e_ref  : (pack+1, 128) f32  fused table:
                                 rows 0..pack-1 : freqs_tiled * onehot(l//dim == p)
                                 row  pack      : phase_tiled (0 / pi/2)
    out_ref: (TB, 128)     f32
    """
    # One MXU matmul does per-lane time expansion + freq mul + phase add;
    # the VPU only runs the sin polynomial (cos(x) == sin(x + pi/2)).
    args = jnp.dot(t_ref[...], e_ref[...],
                   preferred_element_type=jnp.float32,
                   precision=jax.lax.Precision.HIGHEST)
    out_ref[...] = jnp.sin(args)


def _time_embedding_simple_kernel(t_ref, fp_ref, out_ref):
    """Fallback path (dim >= 128 or dim does not divide 128).

    t_ref  : (TB, 2)    f32  [time | 1.0]
    fp_ref : (2, dim)   f32  [freqs_full ; phase]
    out_ref: (TB, dim)  f32
    """
    args = jnp.dot(t_ref[...], fp_ref[...],
                   preferred_element_type=jnp.float32,
                   precision=jax.lax.Precision.HIGHEST)
    out_ref[...] = jnp.sin(args)


# ----------------------------- wrappers ------------------------------------ #

def _time_embedding_packed(t_f32: jax.Array, dim: int) -> jax.Array:
    b = t_f32.shape[0]
    pack = _LANES // dim
    b_pad = -(-b // pack) * pack                 # pad so the packed path always applies
    if b_pad != b:
        t_f32 = jnp.concatenate(
            [t_f32, jnp.zeros((b_pad - b,), jnp.float32)])
    rows = b_pad // pack

    freqs_full, phase = _freq_phase_tables(dim)
    freqs_tiled = jnp.tile(freqs_full, pack)                           # (128,)
    phase_tiled = jnp.tile(phase, pack)                                # (128,)
    lane = jnp.arange(_LANES, dtype=jnp.int32)
    one_hot = (lane[None, :] // dim
               == jnp.arange(pack, dtype=jnp.int32)[:, None]).astype(jnp.float32)
    # Fused expand / freq / phase table: (pack+1, 128).
    e_aug = jnp.concatenate(
        [one_hot * freqs_tiled[None, :], phase_tiled[None, :]], axis=0)

    t_packed = t_f32.reshape(rows, pack)          # row r holds times r*pack..+pack-1
    t_aug = jnp.concatenate(
        [t_packed, jnp.ones((rows, 1), jnp.float32)], axis=1)          # (rows, pack+1)

    tb = _pick_block_rows(rows, _MAX_BLOCK_ROWS_PACKED)

    out_packed = pl.pallas_call(
        _time_embedding_packed_kernel,
        out_shape=jax.ShapeDtypeStruct((rows, _LANES), jnp.float32),
        grid=(pl.cdiv(rows, tb),),
        in_specs=[
            pl.BlockSpec((tb, pack + 1), lambda i: (i, 0)),
            pl.BlockSpec((pack + 1, _LANES), lambda i: (0, 0)),   # constants resident
        ],
        out_specs=pl.BlockSpec((tb, _LANES), lambda i: (i, 0)),
        compiler_params=pltpu.CompilerParams(
            dimension_semantics=("parallel",),
            vmem_limit_bytes=_VMEM_LIMIT),
    )(t_aug, e_aug)

    # Pure layout plumbing: (rows, 128) row-major == (b_pad, dim) row-major.
    out = out_packed.reshape(b_pad, dim)
    return out[:b] if b_pad != b else out


def _time_embedding_simple(t_f32: jax.Array, dim: int) -> jax.Array:
    b = t_f32.shape[0]
    freqs_full, phase = _freq_phase_tables(dim)
    fp = jnp.stack([freqs_full, phase], axis=0)                        # (2, dim)
    t_aug = jnp.stack([t_f32, jnp.ones_like(t_f32)], axis=1)           # (b, 2)

    max_rows = min(_MAX_BLOCK_BATCH,
                   max(8, _OUT_BLOCK_BYTES_BUDGET // (dim * 4)))
    tb = _pick_block_rows(b, max_rows)

    return pl.pallas_call(
        _time_embedding_simple_kernel,
        out_shape=jax.ShapeDtypeStruct((b, dim), jnp.float32),
        grid=(pl.cdiv(b, tb),),
        in_specs=[
            pl.BlockSpec((tb, 2), lambda i: (i, 0)),
            pl.BlockSpec((2, dim), lambda i: (0, 0)),                  # constants resident
        ],
        out_specs=pl.BlockSpec((tb, dim), lambda i: (i, 0)),
        compiler_params=pltpu.CompilerParams(
            dimension_semantics=("parallel",),
            vmem_limit_bytes=_VMEM_LIMIT),
    )(t_aug, fp)


@functools.partial(jax.jit, static_argnames=("dim",))
def time_embedding(time: jax.Array, dim: int) -> jax.Array:
    """`time` has shape (B,); returns (B, dim) float32 sinusoidal embeddings."""
    assert dim % 2 == 0 and dim >= 4, "dim must be even and >= 4"
    t_f32 = time.astype(jnp.float32)
    if dim < _LANES and _LANES % dim == 0:
        return _time_embedding_packed(t_f32, dim)     # lane-dense packed path
    return _time_embedding_simple(t_f32, dim)


# ----------------------------- reference / test ----------------------------- #

def _reference(time: jax.Array, dim: int) -> jax.Array:
    half = dim // 2
    emb = math.log(10000.0) / (half - 1)
    emb = jnp.exp(jnp.arange(half, dtype=jnp.float32) * -emb)
    emb = time.astype(jnp.float32)[:, None] * emb[None]
    return jnp.concatenate([jnp.sin(emb), jnp.cos(emb)], axis=-1)


if __name__ == "__main__":
    key = jax.random.PRNGKey(0)

    # Packed (lane-dense) path: B divides pack.
    B, DIM = 8, 32
    time = jax.random.uniform(key, (B,), dtype=jnp.float32) * 1000.0
    out = time_embedding(time, DIM)
    jax.block_until_ready(out)
    assert out.shape == (B, DIM)
    assert jnp.allclose(out, _reference(time, DIM), atol=1e-4, rtol=1e-5)

    # Fallback path: dim does not divide 128.
    B2, DIM2 = 16, 20
    time2 = jax.random.uniform(jax.random.PRNGKey(1), (B2,), dtype=jnp.float32) * 1000.0
    out2 = time_embedding(time2, DIM2)
    jax.block_until_ready(out2)
    assert jnp.allclose(out2, _reference(time2, DIM2), atol=1e-4, rtol=1e-5)

    # Packed path with batch padding (B not a multiple of pack).
    B3, DIM3 = 5, 64
    time3 = jax.random.uniform(jax.random.PRNGKey(2), (B3,), dtype=jnp.float32) * 1000.0
    out3 = time_embedding(time3, DIM3)
    jax.block_until_ready(out3)
    assert out3.shape == (B3, DIM3)
    assert jnp.allclose(out3, _reference(time3, DIM3), atol=1e-4, rtol=1e-5)

    print("KERNEL_OK")
</pallas_src>

<mosaic_0001>
module attributes {stable_mosaic.version = 11 : i64} {
  func.func @_time_embedding_packed_kernel(%arg0: i32, %arg1: memref<2x5xf32, #tpu.memory_space<vmem>>, %arg2: memref<5x128xf32, #tpu.memory_space<vmem>>, %arg3: memref<2x128xf32, #tpu.memory_space<vmem>>) attributes {dimension_semantics = [#tpu.dimension_semantics<parallel>], iteration_bounds = array<i64: 1>, scalar_prefetch = 0 : i64, scratch_operands = 0 : i64, tpu.core_type = #tpu.core_type<tc>, window_params = [{transform_indices = @transform_0, window_bounds = array<i64: 2, 5>}, {pipeline_mode = #tpu.pipeline_mode<synchronous>, transform_indices = @transform_1, window_bounds = array<i64: 5, 128>}, {transform_indices = @transform_2, window_bounds = array<i64: 2, 128>}]} {
    %c0 = arith.constant 0 : index
    %c0_0 = arith.constant 0 : index
    %0 = vector.load %arg1[%c0, %c0_0] : memref<2x5xf32, #tpu.memory_space<vmem>>, vector<2x5xf32>
    %c0_1 = arith.constant 0 : index
    %c0_2 = arith.constant 0 : index
    %1 = vector.load %arg2[%c0_1, %c0_2] : memref<5x128xf32, #tpu.memory_space<vmem>>, vector<5x128xf32>
    %cst = arith.constant dense<0.000000e+00> : vector<2x128xf32>
    %2 = tpu.matmul %0, %1, %cst {dimension_numbers = #tpu.dot_dimension_numbers<[1], [0], [0], [1], [0, 0, 1, 1], [], []>, precision = #tpu.contract_precision<fp32>} : vector<2x5xf32>, vector<5x128xf32>, vector<2x128xf32> -> vector<2x128xf32>
    %3 = math.sin %2 : vector<2x128xf32>
    %c0_3 = arith.constant 0 : index
    %c0_4 = arith.constant 0 : index
    %4 = vector.load %arg3[%c0_3, %c0_4] : memref<2x128xf32, #tpu.memory_space<vmem>>, vector<2x128xf32>
    tpu.vector_store %arg3[%c0_3, %c0_4], %3 {strides = array<i32>} : memref<2x128xf32, #tpu.memory_space<vmem>>, vector<2x128xf32>,
    return
  }
  func.func @transform_0(%arg0: i32) -> (i32, i32) {
    %c0_i32 = arith.constant 0 : i32
    %c0_i32_0 = arith.constant 0 : i32
    return %arg0, %c0_i32 : i32, i32
  }
  func.func @transform_1(%arg0: i32) -> (i32, i32) {
    %c0_i32 = arith.constant 0 : i32
    %c0_i32_0 = arith.constant 0 : i32
    %c0_i32_1 = arith.constant 0 : i32
    return %c0_i32, %c0_i32_0 : i32, i32
  }
  func.func @transform_2(%arg0: i32) -> (i32, i32) {
    %c0_i32 = arith.constant 0 : i32
    %c0_i32_0 = arith.constant 0 : i32
    return %arg0, %c0_i32 : i32, i32
  }
}

</mosaic_0001>

<llo_original>
// kernel: tile.12
$region0: #{tile.12}
  #allocation0 [shape = 's32[1]{0}', space=sflag, size = 0x4, scoped, tag = 'scoped memory for tile.12']
  %s0 = inlined_call_operand.vmem [shape: f32[32], index: 0, kind: input, shape index: {}]
  %s1 = inlined_call_operand.vmem [shape: f32[4,32], index: 1, kind: output, shape index: {}]
  // Predicated region
  $region2: #{tile.12} parent=0 // pred_check
    _
  $region3: #{tile.12} parent=0 // pred_check_branch
    %3 = sbr.rel (0) target = $region5
  $region4: #{tile.12} parent=0 // pred_region
    _
  $region5: #{tile.12} parent=0 // pred_fallthru
    _
  %v4 = vld [vmem:[%s0] ss:$0 sm:$0xff]
  %5 = vst [vmem:[%s1] sm:$0xf] %v4

// kernel: mul.7
$region0: #{mul.7}
  %s0 = inlined_call_operand.vmem [shape: f32[4,32], index: 0, kind: input, shape index: {}]
  %s1 = inlined_call_operand.vmem [shape: f32[128], index: 1, kind: output, shape index: {}]
  $region1: #{mul.7} parent=0
    #allocation0 [shape = 'u8[4096]{0}', space=vmem, size = 0x1000, scoped, tag = 'scoped mem for output reshape']
    #allocation1 [shape = 'u8[4096]{0}', space=vmem, size = 0x1000, scoped, tag = 'scoped mem for input reshape']
    %s3 = sshll.u32 1, 4
    %s4 = ssub.s32 %s3, 1
    %v5 = vld [vmem:[%s0] sm:%s4]
    %6 = vst [vmem:[#allocation1] sm:%s4] %v5
    %v7 = vld [vmem:[#allocation1] sm:$0x1]
    %vm8 = vcmask 261120
    %9 = vst.msk [vmem:[#allocation0] sm:$0x1] %vm8, %v7
    %s10 = scalar_lea.vmem [#allocation1], 3
    %v11 = vld [vmem:[%s10] sm:$0x1]
    %12 = vrot.lane.b32.xlu0 %v11, 96
    %v13 = vpop.permute.xlu0 %12
    %vm14 = vcmask 1048320
    %15 = vst.msk [vmem:[#allocation0] sm:$0x1] %vm14, %v13
    %s16 = scalar_lea.vmem [#allocation1], 2
    %v17 = vld [vmem:[%s16] sm:$0x1]
    %18 = vrot.lane.b32.xlu0 %v17, 64
    %v19 = vpop.permute.xlu0 %18
    %vm20 = vcmask 785920
    %21 = vst.msk [vmem:[#allocation0] sm:$0x1] %vm20, %v19
    %s22 = scalar_lea.vmem [#allocation1], 1
    %v23 = vld [vmem:[%s22] sm:$0x1]
    %24 = vrot.lane.b32.xlu0 %v23, 32
    %v25 = vpop.permute.xlu0 %24
    %vm26 = vcmask 523520
    %27 = vst.msk [vmem:[#allocation0] sm:$0x1] %vm26, %v25
    %s29 = sshll.u32 1, 1
    %s30 = ssub.s32 %s29, 1
    %v32 = vld [vmem:[#allocation0] sm:%s30]
    %s33 = sshll.u32 1, 1
    %s34 = ssub.s32 %s33, 1
    %35 = vst [vmem:[%s1] sm:%s34] %v32

// kernel: tile.17
$region0: #{tile.17}
  %s0 = inlined_call_operand.vmem [shape: f32[4,32], index: 0, kind: input, shape index: {}]
  %s1 = inlined_call_operand.vmem [shape: f32[1,128], index: 1, kind: output, shape index: {}]
  $region1: #{tile.17} parent=0
    #allocation0 [shape = 'u8[4096]{0}', space=vmem, size = 0x1000, scoped, tag = 'scoped mem for output reshape']
    #allocation1 [shape = 'u8[4096]{0}', space=vmem, size = 0x1000, scoped, tag = 'scoped mem for input reshape']
    %s3 = sshll.u32 1, 4
    %s4 = ssub.s32 %s3, 1
    %v5 = vld [vmem:[%s0] sm:%s4]
    %6 = vst [vmem:[#allocation1] sm:%s4] %v5
    %v7 = vld [vmem:[#allocation1] sm:$0x1]
    %vm8 = vcmask 261120
    %9 = vst.msk [vmem:[#allocation0] sm:$0x1] %vm8, %v7
    %s10 = scalar_lea.vmem [#allocation1], 3
    %v11 = vld [vmem:[%s10] sm:$0x1]
    %12 = vrot.lane.b32.xlu0 %v11, 96
    %v13 = vpop.permute.xlu0 %12
    %vm14 = vcmask 1048320
    %15 = vst.msk [vmem:[#allocation0] sm:$0x1] %vm14, %v13
    %s16 = scalar_lea.vmem [#allocation1], 2
    %v17 = vld [vmem:[%s16] sm:$0x1]
    %18 = vrot.lane.b32.xlu0 %v17, 64
    %v19 = vpop.permute.xlu0 %18
    %vm20 = vcmask 785920
    %21 = vst.msk [vmem:[#allocation0] sm:$0x1] %vm20, %v19
    %s22 = scalar_lea.vmem [#allocation1], 1
    %v23 = vld [vmem:[%s22] sm:$0x1]
    %24 = vrot.lane.b32.xlu0 %v23, 32
    %v25 = vpop.permute.xlu0 %24
    %vm26 = vcmask 523520
    %27 = vst.msk [vmem:[#allocation0] sm:$0x1] %vm26, %v25
    %s29 = sshll.u32 1, 1
    %s30 = ssub.s32 %s29, 1
    %v32 = vld [vmem:[#allocation0] sm:%s30]
    %s33 = sshll.u32 1, 1
    %s34 = ssub.s32 %s33, 1
    %35 = vst [vmem:[%s1] sm:%s34] %v32

// kernel: time_embedding.1
$region0: #{time_embedding.1}
  #allocation0 [shape = 'u32[]', space=smem, size = 0x4, offset = 0x4, fixed_abs, tag = 'smem constant byte address 0x4 - core index']
  #allocation1 [shape = 'u32[144,128]{1,0:T(1,128)}', space=vmem, size = 0x12000, scoped, tag = 'internal scratch']
  %s0 = inlined_call_operand.vmem [shape: f32[2,5], index: 0, kind: input, shape index: {}]
  %s1 = inlined_call_operand.vmem [shape: f32[5,128], index: 1, kind: input, shape index: {}]
  %s2 = inlined_call_operand.vmem [shape: f32[2,128], index: 2, kind: output, shape index: {}]
  %s3 = sld [smem:[#allocation0]]
  $region18: #{time_embedding.1} parent=0
    _
  %s5 = ssub.s32 1, %s3
  %s6 = scalar_select 0, %s5, %s3
  // Predicated region
  $region2: #{time_embedding.1} parent=0 // pred_check
    _
  $region3: #{time_embedding.1} parent=0 // pred_check_branch
    %8 = sbr.rel (0) target = $region5
  $region4: #{time_embedding.1} parent=0 // pred_region
    _
  $region5: #{time_embedding.1} parent=0 // pred_fallthru
    _
  // Predicated region
  $region6: #{time_embedding.1} parent=0 // pred_check
    _
  $region7: #{time_embedding.1} parent=0 // pred_check_branch
    %10 = sbr.rel (0) target = $region9
  $region8: #{time_embedding.1} parent=0 // pred_region
    _
  $region9: #{time_embedding.1} parent=0 // pred_fallthru
    _
  %v11 = vld [vmem:[%s0] sm:$0x3]
  %v12 = vld [vmem:[%s1] sm:$0x1f]
  %vm13 = vcmask 39936
  %v15 = vsel %vm13, %v11, 0
  %vm17 = vcmask 1044480
  %v19 = vsel %vm17, %v12, 0
  %21 = vmatprep.subr.mxu0 0.0
  %22 = vmatpush1.msra.mxu0 0.0
  %23 = vmatprep.subr.mxu0 0.0
  %24 = vmatpush1.msra.mxu0 0.0
  %25 = vmatprep.subr.mxu0 0.0
  %26 = vmatpush1.msra.mxu0 0.0
  %27 = vmatprep.subr.mxu0 0.0
  %28 = vmatpush1.msra.mxu0 0.0
  %29 = vmatprep.subr.mxu0 0.0
  %30 = vmatpush1.msra.mxu0 0.0
  %31 = vmatprep.subr.mxu0 0.0
  %32 = vmatpush1.msra.mxu0 0.0
  %33 = vmatprep.subr.mxu0 0.0
  %34 = vmatpush1.msra.mxu0 0.0
  %35 = vmatprep.subr.mxu0 0.0
  %36 = vmatpush1.msra.mxu0 0.0
  %37 = vmatprep.subr.mxu0 0.0
  %38 = vmatpush1.msra.mxu0 0.0
  %39 = vmatprep.subr.mxu0 0.0
  %40 = vmatpush1.msra.mxu0 0.0
  %41 = vmatprep.subr.mxu0 0.0
  %42 = vmatpush1.msra.mxu0 0.0
  %43 = vmatprep.subr.mxu0 0.0
  %44 = vmatpush1.msra.mxu0 0.0
  %45 = vmatprep.subr.mxu0 0.0
  %46 = vmatpush1.msra.mxu0 0.0
  %47 = vmatprep.subr.mxu0 0.0
  %48 = vmatpush1.msra.mxu0 0.0
  %49 = vmatprep.subr.mxu0 0.0
  %50 = vmatpush1.msra.mxu0 0.0
  %51 = vmatprep.subr.mxu0 0.0
  %v52 = vand.u32 %v19, 4294901760
  %53 = vmatpush1.msra.mxu0 %v52
  %54 = vmatprep.subr.mxu0 0.0
  %55 = vmatpush2.msra.mxu0 0.0
  %56 = vmatprep.subr.mxu0 0.0
  %57 = vmatpush2.msra.mxu0 0.0
  %58 = vmatprep.subr.mxu0 0.0
  %59 = vmatpush2.msra.mxu0 0.0
  %60 = vmatprep.subr.mxu0 0.0
  %61 = vmatpush2.msra.mxu0 0.0
  %62 = vmatprep.subr.mxu0 0.0
  %63 = vmatpush2.msra.mxu0 0.0
  %64 = vmatprep.subr.mxu0 0.0
  %65 = vmatpush2.msra.mxu0 0.0
  %66 = vmatprep.subr.mxu0 0.0
  %67 = vmatpush2.msra.mxu0 0.0
  %68 = vmatprep.subr.mxu0 0.0
  %69 = vmatpush2.msra.mxu0 0.0
  %70 = vmatprep.subr.mxu0 0.0
  %71 = vmatpush2.msra.mxu0 0.0
  %72 = vmatprep.subr.mxu0 0.0
  %73 = vmatpush2.msra.mxu0 0.0
  %74 = vmatprep.subr.mxu0 0.0
  %75 = vmatpush2.msra.mxu0 0.0
  %76 = vmatprep.subr.mxu0 0.0
  %77 = vmatpush2.msra.mxu0 0.0
  %78 = vmatprep.subr.mxu0 0.0
  %79 = vmatpush2.msra.mxu0 0.0
  %80 = vmatprep.subr.mxu0 0.0
  %81 = vmatpush2.msra.mxu0 0.0
  %82 = vmatprep.subr.mxu0 0.0
  %83 = vmatpush2.msra.mxu0 0.0
  %84 = vmatprep.subr.mxu0 0.0
  %85 = vmatpush2.msra.mxu0 0.0
  %86 = vmatprep.mubr.f32.mxu0 0.0
  %v87 = vand.u32 %v15, 4294901760
  %v88 = vsub.f32 %v15, %v87
  %v89 = vand.u32 %v88, 4294901760
  %v90 = vsub.f32 %v88, %v89
  %v91 = vand.u32 %v90, 4294901760
  %92 = vmatmul.mubr.f32.gmra.mxu0 %v91
  %v93 = vpop.f32.mrf.mxu0
  %v94 = vadd.f32 0.0, %v93
  %v95 = vpop.f32.mrf.mxu0
  %96 = vdwg.mxu0
  %97 = vmatprep.subr.mxu0 0.0
  %98 = vmatpush1.msra.mxu0 0.0
  %99 = vmatprep.subr.mxu0 0.0
  %100 = vmatpush1.msra.mxu0 0.0
  %101 = vmatprep.subr.mxu0 0.0
  %102 = vmatpush1.msra.mxu0 0.0
  %103 = vmatprep.subr.mxu0 0.0
  %104 = vmatpush1.msra.mxu0 0.0
  %105 = vmatprep.subr.mxu0 0.0
  %106 = vmatpush1.msra.mxu0 0.0
  %107 = vmatprep.subr.mxu0 0.0
  %108 = vmatpush1.msra.mxu0 0.0
  %109 = vmatprep.subr.mxu0 0.0
  %110 = vmatpush1.msra.mxu0 0.0
  %111 = vmatprep.subr.mxu0 0.0
  %112 = vmatpush1.msra.mxu0 0.0
  %113 = vmatprep.subr.mxu0 0.0
  %114 = vmatpush1.msra.mxu0 0.0
  %115 = vmatprep.subr.mxu0 0.0
  %116 = vmatpush1.msra.mxu0 0.0
  %117 = vmatprep.subr.mxu0 0.0
  %118 = vmatpush1.msra.mxu0 0.0
  %119 = vmatprep.subr.mxu0 0.0
  %120 = vmatpush1.msra.mxu0 0.0
  %121 = vmatprep.subr.mxu0 0.0
  %122 = vmatpush1.msra.mxu0 0.0
  %123 = vmatprep.subr.mxu0 0.0
  %124 = vmatpush1.msra.mxu0 0.0
  %125 = vmatprep.subr.mxu0 0.0
  %126 = vmatpush1.msra.mxu0 0.0
  %127 = vmatprep.subr.mxu0 0.0
  %v128 = vand.u32 %v19, 4294901760
  %v129 = vsub.f32 %v19, %v128
  %v130 = vand.u32 %v129, 4294901760
  %v131 = vsub.f32 %v129, %v130
  %v132 = vand.u32 %v131, 4294901760
  %133 = vmatpush1.msra.mxu0 %v132
  %134 = vmatprep.subr.mxu0 0.0
  %135 = vmatpush2.msra.mxu0 0.0
  %136 = vmatprep.subr.mxu0 0.0
  %137 = vmatpush2.msra.mxu0 0.0
  %138 = vmatprep.subr.mxu0 0.0
  %139 = vmatpush2.msra.mxu0 0.0
  %140 = vmatprep.subr.mxu0 0.0
  %141 = vmatpush2.msra.mxu0 0.0
  %142 = vmatprep.subr.mxu0 0.0
  %143 = vmatpush2.msra.mxu0 0.0
  %144 = vmatprep.subr.mxu0 0.0
  %145 = vmatpush2.msra.mxu0 0.0
  %146 = vmatprep.subr.mxu0 0.0
  %147 = vmatpush2.msra.mxu0 0.0
  %148 = vmatprep.subr.mxu0 0.0
  %149 = vmatpush2.msra.mxu0 0.0
  %150 = vmatprep.subr.mxu0 0.0
  %151 = vmatpush2.msra.mxu0 0.0
  %152 = vmatprep.subr.mxu0 0.0
  %153 = vmatpush2.msra.mxu0 0.0
  %154 = vmatprep.subr.mxu0 0.0
  %155 = vmatpush2.msra.mxu0 0.0
  %156 = vmatprep.subr.mxu0 0.0
  %157 = vmatpush2.msra.mxu0 0.0
  %158 = vmatprep.subr.mxu0 0.0
  %159 = vmatpush2.msra.mxu0 0.0
  %160 = vmatprep.subr.mxu0 0.0
  %161 = vmatpush2.msra.mxu0 0.0
  %162 = vmatprep.subr.mxu0 0.0
  %163 = vmatpush2.msra.mxu0 0.0
  %164 = vmatprep.subr.mxu0 0.0
  %165 = vmatpush2.msra.mxu0 0.0
  %166 = vmatprep.mubr.f32.mxu0 0.0
  %v167 = vand.u32 %v15, 4294901760
  %168 = vmatmul.mubr.f32.gmra.mxu0 %v167
  %v169 = vpop.f32.mrf.mxu0
  %v170 = vadd.f32 %v94, %v169
  %v171 = vpop.f32.mrf.mxu0
  %172 = vdwg.mxu0
  %173 = vmatprep.subr.mxu0 0.0
  %174 = vmatpush1.msra.mxu0 0.0
  %175 = vmatprep.subr.mxu0 0.0
  %176 = vmatpush1.msra.mxu0 0.0
  %177 = vmatprep.subr.mxu0 0.0
  %178 = vmatpush1.msra.mxu0 0.0
  %179 = vmatprep.subr.mxu0 0.0
  %180 = vmatpush1.msra.mxu0 0.0
  %181 = vmatprep.subr.mxu0 0.0
  %182 = vmatpush1.msra.mxu0 0.0
  %183 = vmatprep.subr.mxu0 0.0
  %184 = vmatpush1.msra.mxu0 0.0
  %185 = vmatprep.subr.mxu0 0.0
  %186 = vmatpush1.msra.mxu0 0.0
  %187 = vmatprep.subr.mxu0 0.0
  %188 = vmatpush1.msra.mxu0 0.0
  %189 = vmatprep.subr.mxu0 0.0
  %190 = vmatpush1.msra.mxu0 0.0
  %191 = vmatprep.subr.mxu0 0.0
  %192 = vmatpush1.msra.mxu0 0.0
  %193 = vmatprep.subr.mxu0 0.0
  %194 = vmatpush1.msra.mxu0 0.0
  %195 = vmatprep.subr.mxu0 0.0
  %196 = vmatpush1.msra.mxu0 0.0
  %197 = vmatprep.subr.mxu0 0.0
  %198 = vmatpush1.msra.mxu0 0.0
  %199 = vmatprep.subr.mxu0 0.0
  %200 = vmatpush1.msra.mxu0 0.0
  %201 = vmatprep.subr.mxu0 0.0
  %202 = vmatpush1.msra.mxu0 0.0
  %203 = vmatprep.subr.mxu0 0.0
  %v204 = vand.u32 %v19, 4294901760
  %v205 = vsub.f32 %v19, %v204
  %206 = vmatpush1.msra.mxu0 %v205
  %207 = vmatprep.subr.mxu0 0.0
  %208 = vmatpush2.msra.mxu0 0.0
  %209 = vmatprep.subr.mxu0 0.0
  %210 = vmatpush2.msra.mxu0 0.0
  %211 = vmatprep.subr.mxu0 0.0
  %212 = vmatpush2.msra.mxu0 0.0
  %213 = vmatprep.subr.mxu0 0.0
  %214 = vmatpush2.msra.mxu0 0.0
  %215 = vmatprep.subr.mxu0 0.0
  %216 = vmatpush2.msra.mxu0 0.0
  %217 = vmatprep.subr.mxu0 0.0
  %218 = vmatpush2.msra.mxu0 0.0
  %219 = vmatprep.subr.mxu0 0.0
  %220 = vmatpush2.msra.mxu0 0.0
  %221 = vmatprep.subr.mxu0 0.0
  %222 = vmatpush2.msra.mxu0 0.0
  %223 = vmatprep.subr.mxu0 0.0
  %224 = vmatpush2.msra.mxu0 0.0
  %225 = vmatprep.subr.mxu0 0.0
  %226 = vmatpush2.msra.mxu0 0.0
  %227 = vmatprep.subr.mxu0 0.0
  %228 = vmatpush2.msra.mxu0 0.0
  %229 = vmatprep.subr.mxu0 0.0
  %230 = vmatpush2.msra.mxu0 0.0
  %231 = vmatprep.subr.mxu0 0.0
  %232 = vmatpush2.msra.mxu0 0.0
  %233 = vmatprep.subr.mxu0 0.0
  %234 = vmatpush2.msra.mxu0 0.0
  %235 = vmatprep.subr.mxu0 0.0
  %236 = vmatpush2.msra.mxu0 0.0
  %237 = vmatprep.subr.mxu0 0.0
  %238 = vmatpush2.msra.mxu0 0.0
  %239 = vmatprep.mubr.f32.mxu0 0.0
  %v240 = vand.u32 %v15, 4294901760
  %v241 = vsub.f32 %v15, %v240
  %242 = vmatmul.mubr.f32.gmra.mxu0 %v241
  %v243 = vpop.f32.mrf.mxu0
  %v244 = vadd.f32 %v170, %v243
  %v245 = vpop.f32.mrf.mxu0
  %246 = vdwg.mxu0
  %247 = vmatprep.subr.mxu0 0.0
  %248 = vmatpush1.msra.mxu0 0.0
  %249 = vmatprep.subr.mxu0 0.0
  %250 = vmatpush1.msra.mxu0 0.0
  %251 = vmatprep.subr.mxu0 0.0
  %252 = vmatpush1.msra.mxu0 0.0
  %253 = vmatprep.subr.mxu0 0.0
  %254 = vmatpush1.msra.mxu0 0.0
  %255 = vmatprep.subr.mxu0 0.0
  %256 = vmatpush1.msra.mxu0 0.0
  %257 = vmatprep.subr.mxu0 0.0
  %258 = vmatpush1.msra.mxu0 0.0
  %259 = vmatprep.subr.mxu0 0.0
  %260 = vmatpush1.msra.mxu0 0.0
  %261 = vmatprep.subr.mxu0 0.0
  %262 = vmatpush1.msra.mxu0 0.0
  %263 = vmatprep.subr.mxu0 0.0
  %264 = vmatpush1.msra.mxu0 0.0
  %265 = vmatprep.subr.mxu0 0.0
  %266 = vmatpush1.msra.mxu0 0.0
  %267 = vmatprep.subr.mxu0 0.0
  %268 = vmatpush1.msra.mxu0 0.0
  %269 = vmatprep.subr.mxu0 0.0
  %270 = vmatpush1.msra.mxu0 0.0
  %271 = vmatprep.subr.mxu0 0.0
  %272 = vmatpush1.msra.mxu0 0.0
  %273 = vmatprep.subr.mxu0 0.0
  %274 = vmatpush1.msra.mxu0 0.0
  %275 = vmatprep.subr.mxu0 0.0
  %276 = vmatpush1.msra.mxu0 0.0
  %277 = vmatprep.subr.mxu0 0.0
  %v278 = vand.u32 %v19, 4294901760
  %279 = vmatpush1.msra.mxu0 %v278
  %280 = vmatprep.subr.mxu0 0.0
  %281 = vmatpush2.msra.mxu0 0.0
  %282 = vmatprep.subr.mxu0 0.0
  %283 = vmatpush2.msra.mxu0 0.0
  %284 = vmatprep.subr.mxu0 0.0
  %285 = vmatpush2.msra.mxu0 0.0
  %286 = vmatprep.subr.mxu0 0.0
  %287 = vmatpush2.msra.mxu0 0.0
  %288 = vmatprep.subr.mxu0 0.0
  %289 = vmatpush2.msra.mxu0 0.0
  %290 = vmatprep.subr.mxu0 0.0
  %291 = vmatpush2.msra.mxu0 0.0
  %292 = vmatprep.subr.mxu0 0.0
  %293 = vmatpush2.msra.mxu0 0.0
  %294 = vmatprep.subr.mxu0 0.0
  %295 = vmatpush2.msra.mxu0 0.0
  %296 = vmatprep.subr.mxu0 0.0
  %297 = vmatpush2.msra.mxu0 0.0
  %298 = vmatprep.subr.mxu0 0.0
  %299 = vmatpush2.msra.mxu0 0.0
  %300 = vmatprep.subr.mxu0 0.0
  %301 = vmatpush2.msra.mxu0 0.0
  %302 = vmatprep.subr.mxu0 0.0
  %303 = vmatpush2.msra.mxu0 0.0
  %304 = vmatprep.subr.mxu0 0.0
  %305 = vmatpush2.msra.mxu0 0.0
  %306 = vmatprep.subr.mxu0 0.0
  %307 = vmatpush2.msra.mxu0 0.0
  %308 = vmatprep.subr.mxu0 0.0
  %309 = vmatpush2.msra.mxu0 0.0
  %310 = vmatprep.subr.mxu0 0.0
  %311 = vmatpush2.msra.mxu0 0.0
  %312 = vmatprep.mubr.f32.mxu0 0.0
  %v313 = vand.u32 %v15, 4294901760
  %v314 = vsub.f32 %v15, %v313
  %v315 = vand.u32 %v314, 4294901760
  %316 = vmatmul.mubr.f32.gmra.mxu0 %v315
  %v317 = vpop.f32.mrf.mxu0
  %v318 = vadd.f32 %v244, %v317
  %v319 = vpop.f32.mrf.mxu0
  %320 = vdwg.mxu0
  %321 = vmatprep.subr.mxu0 0.0
  %322 = vmatpush1.msra.mxu0 0.0
  %323 = vmatprep.subr.mxu0 0.0
  %324 = vmatpush1.msra.mxu0 0.0
  %325 = vmatprep.subr.mxu0 0.0
  %326 = vmatpush1.msra.mxu0 0.0
  %327 = vmatprep.subr.mxu0 0.0
  %328 = vmatpush1.msra.mxu0 0.0
  %329 = vmatprep.subr.mxu0 0.0
  %330 = vmatpush1.msra.mxu0 0.0
  %331 = vmatprep.subr.mxu0 0.0
  %332 = vmatpush1.msra.mxu0 0.0
  %333 = vmatprep.subr.mxu0 0.0
  %334 = vmatpush1.msra.mxu0 0.0
  %335 = vmatprep.subr.mxu0 0.0
  %336 = vmatpush1.msra.mxu0 0.0
  %337 = vmatprep.subr.mxu0 0.0
  %338 = vmatpush1.msra.mxu0 0.0
  %339 = vmatprep.subr.mxu0 0.0
  %340 = vmatpush1.msra.mxu0 0.0
  %341 = vmatprep.subr.mxu0 0.0
  %342 = vmatpush1.msra.mxu0 0.0
  %343 = vmatprep.subr.mxu0 0.0
  %344 = vmatpush1.msra.mxu0 0.0
  %345 = vmatprep.subr.mxu0 0.0
  %346 = vmatpush1.msra.mxu0 0.0
  %347 = vmatprep.subr.mxu0 0.0
  %348 = vmatpush1.msra.mxu0 0.0
  %349 = vmatprep.subr.mxu0 0.0
  %350 = vmatpush1.msra.mxu0 0.0
  %351 = vmatprep.subr.mxu0 0.0
  %v352 = vand.u32 %v19, 4294901760
  %v353 = vsub.f32 %v19, %v352
  %v354 = vand.u32 %v353, 4294901760
  %355 = vmatpush1.msra.mxu0 %v354
  %356 = vmatprep.subr.mxu0 0.0
  %357 = vmatpush2.msra.mxu0 0.0
  %358 = vmatprep.subr.mxu0 0.0
  %359 = vmatpush2.msra.mxu0 0.0
  %360 = vmatprep.subr.mxu0 0.0
  %361 = vmatpush2.msra.mxu0 0.0
  %362 = vmatprep.subr.mxu0 0.0
  %363 = vmatpush2.msra.mxu0 0.0
  %364 = vmatprep.subr.mxu0 0.0
  %365 = vmatpush2.msra.mxu0 0.0
  %366 = vmatprep.subr.mxu0 0.0
  %367 = vmatpush2.msra.mxu0 0.0
  %368 = vmatprep.subr.mxu0 0.0
  %369 = vmatpush2.msra.mxu0 0.0
  %370 = vmatprep.subr.mxu0 0.0
  %371 = vmatpush2.msra.mxu0 0.0
  %372 = vmatprep.subr.mxu0 0.0
  %373 = vmatpush2.msra.mxu0 0.0
  %374 = vmatprep.subr.mxu0 0.0
  %375 = vmatpush2.msra.mxu0 0.0
  %376 = vmatprep.subr.mxu0 0.0
  %377 = vmatpush2.msra.mxu0 0.0
  %378 = vmatprep.subr.mxu0 0.0
  %379 = vmatpush2.msra.mxu0 0.0
  %380 = vmatprep.subr.mxu0 0.0
  %381 = vmatpush2.msra.mxu0 0.0
  %382 = vmatprep.subr.mxu0 0.0
  %383 = vmatpush2.msra.mxu0 0.0
  %384 = vmatprep.subr.mxu0 0.0
  %385 = vmatpush2.msra.mxu0 0.0
  %386 = vmatprep.subr.mxu0 0.0
  %387 = vmatpush2.msra.mxu0 0.0
  %388 = vmatprep.mubr.f32.mxu0 0.0
  %v389 = vand.u32 %v15, 4294901760
  %390 = vmatmul.mubr.f32.gmra.mxu0 %v389
  %v391 = vpop.f32.mrf.mxu0
  %v392 = vadd.f32 %v318, %v391
  %v393 = vpop.f32.mrf.mxu0
  %394 = vdwg.mxu0
  %395 = vmatprep.subr.mxu0 0.0
  %396 = vmatpush1.msra.mxu0 0.0
  %397 = vmatprep.subr.mxu0 0.0
  %398 = vmatpush1.msra.mxu0 0.0
  %399 = vmatprep.subr.mxu0 0.0
  %400 = vmatpush1.msra.mxu0 0.0
  %401 = vmatprep.subr.mxu0 0.0
  %402 = vmatpush1.msra.mxu0 0.0
  %403 = vmatprep.subr.mxu0 0.0
  %404 = vmatpush1.msra.mxu0 0.0
  %405 = vmatprep.subr.mxu0 0.0
  %406 = vmatpush1.msra.mxu0 0.0
  %407 = vmatprep.subr.mxu0 0.0
  %408 = vmatpush1.msra.mxu0 0.0
  %409 = vmatprep.subr.mxu0 0.0
  %410 = vmatpush1.msra.mxu0 0.0
  %411 = vmatprep.subr.mxu0 0.0
  %412 = vmatpush1.msra.mxu0 0.0
  %413 = vmatprep.subr.mxu0 0.0
  %414 = vmatpush1.msra.mxu0 0.0
  %415 = vmatprep.subr.mxu0 0.0
  %416 = vmatpush1.msra.mxu0 0.0
  %417 = vmatprep.subr.mxu0 0.0
  %418 = vmatpush1.msra.mxu0 0.0
  %419 = vmatprep.subr.mxu0 0.0
  %420 = vmatpush1.msra.mxu0 0.0
  %421 = vmatprep.subr.mxu0 0.0
  %422 = vmatpush1.msra.mxu0 0.0
  %423 = vmatprep.subr.mxu0 0.0
  %424 = vmatpush1.msra.mxu0 0.0
  %425 = vmatprep.subr.mxu0 0.0
  %v426 = vand.u32 %v19, 4294901760
  %427 = vmatpush1.msra.mxu0 %v426
  %428 = vmatprep.subr.mxu0 0.0
  %429 = vmatpush2.msra.mxu0 0.0
  %430 = vmatprep.subr.mxu0 0.0
  %431 = vmatpush2.msra.mxu0 0.0
  %432 = vmatprep.subr.mxu0 0.0
  %433 = vmatpush2.msra.mxu0 0.0
  %434 = vmatprep.subr.mxu0 0.0
  %435 = vmatpush2.msra.mxu0 0.0
  %436 = vmatprep.subr.mxu0 0.0
  %437 = vmatpush2.msra.mxu0 0.0
  %438 = vmatprep.subr.mxu0 0.0
  %439 = vmatpush2.msra.mxu0 0.0
  %440 = vmatprep.subr.mxu0 0.0
  %441 = vmatpush2.msra.mxu0 0.0
  %442 = vmatprep.subr.mxu0 0.0
  %443 = vmatpush2.msra.mxu0 0.0
  %444 = vmatprep.subr.mxu0 0.0
  %445 = vmatpush2.msra.mxu0 0.0
  %446 = vmatprep.subr.mxu0 0.0
  %447 = vmatpush2.msra.mxu0 0.0
  %448 = vmatprep.subr.mxu0 0.0
  %449 = vmatpush2.msra.mxu0 0.0
  %450 = vmatprep.subr.mxu0 0.0
  %451 = vmatpush2.msra.mxu0 0.0
  %452 = vmatprep.subr.mxu0 0.0
  %453 = vmatpush2.msra.mxu0 0.0
  %454 = vmatprep.subr.mxu0 0.0
  %455 = vmatpush2.msra.mxu0 0.0
  %456 = vmatprep.subr.mxu0 0.0
  %457 = vmatpush2.msra.mxu0 0.0
  %458 = vmatprep.subr.mxu0 0.0
  %459 = vmatpush2.msra.mxu0 0.0
  %460 = vmatprep.mubr.f32.mxu0 0.0
  %v461 = vand.u32 %v15, 4294901760
  %462 = vmatmul.mubr.f32.gmra.mxu0 %v461
  %v463 = vpop.f32.mrf.mxu0
  %v464 = vadd.f32 %v392, %v463
  %v465 = vpop.f32.mrf.mxu0
  %466 = vdwg.mxu0
  %v467 = vand.u32 2147483647, %v464
  %vm468 = vcmp.le.f32.partialorder %v467, 0.7853982
  %vm469 = vcmp.lt.s32.totalorder %v464, 0
  %v470 = vand.u32 %v464, 2139095040
  %v471 = vshrl.u32 %v470, 23
  %v472 = vsub.s32 %v471, 127
  %v473 = vand.u32 2147483647, %v464
  %v474 = vand.u32 %v473, 8388607
  %v475 = vor.u32 %v474, 8388608
  %v476 = vsub.s32 0, %v475
  %v477 = vadd.s32 %v472, 1
  %vm478 = vcmp.gt.s32.totalorder %v477, 0
  %v479 = vsel %vm478, %v477, 0
  %v480 = vshrl.u32 %v479, 5
  %v481 = vand.u32 %v479, 31
  %v482 = vsub.s32 32, %v481
  %v483 = vshrl.u32 683565275, %v482
  %v484 = vshll.u32 683565275, %v481
  %v485 = vshrl.u32 2475754826, %v482
  %v486 = vor.u32 %v484, %v485
  %v487 = vshll.u32 2475754826, %v481
  %v488 = vshrl.u32 2131351028, %v482
  %v489 = vor.u32 %v487, %v488
  %v490 = vshll.u32 2131351028, %v481
  %v491 = vshrl.u32 2102212464, %v482
  %v492 = vor.u32 %v490, %v491
  %v493 = vshll.u32 2102212464, %v481
  %v494 = vshrl.u32 920167782, %v482
  %v495 = vor.u32 %v493, %v494
  %v496 = vshll.u32 920167782, %v481
  %v497 = vshrl.u32 1326507024, %v482
  %v498 = vor.u32 %v496, %v497
  %vm499 = vcmp.lt.s32.totalorder %v480, 1
  %vm500 = vcmp.lt.s32.totalorder %v480, 2
  %vm501 = vcmp.lt.s32.totalorder %v480, 3
  %vm502 = vcmp.lt.s32.totalorder %v480, 4
  %v503 = vsel %vm499, %v483, %v486
  %v504 = vsel %vm502, %v492, 2102212464
  %v505 = vsel %vm501, %v489, %v504
  %v506 = vsel %vm500, %v503, %v505
  %v507 = vsel %vm499, %v486, %v489
  %v508 = vsel %vm502, %v495, 920167782
  %v509 = vsel %vm501, %v492, %v508
  %v510 = vsel %vm500, %v507, %v509
  %v511 = vsel %vm499, %v489, %v492
  %v512 = vsel %vm502, %v498, 1326507024
  %v513 = vsel %vm501, %v495, %v512
  %v514 = vsel %vm500, %v511, %v513
  %v515 = vshll.u32 %v475, 8
  %v516 = vmul.u32.u64.compose %v515, %v514
  %v517 = vextract.low.u32 %v516
  %v518 = vextract.high.u32 %v516
  %v519 = vmul.u32.u64.compose %v515, %v510
  %v520 = vextract.low.u32 %v519
  %v521 = vextract.high.u32 %v519
  %v522 = vmul.u32 %v515, %v506
  %v523 = vadd.s32 %v518, %v520
  %vm524 = vc.u32 %v518, %v520
  %v525 = vadd.s32 %v521, 1
  %v526 = vsel %vm524, %v525, %v521
  %v527 = vadd.s32 %v522, %v526
  %v528 = vadd.s32 %v527, 536870912
  %v529 = vshrl.u32 %v528, 30
  %v530 = vshll.u32 %v529, 30
  %v531 = vsub.s32 %v527, %v530
  %vm532 = vcmp.lt.s32.totalorder %v531, 0
  %v533 = vsub.s32 0, %v531
  %v534 = vsel %vm532, %v533, %v531
  %v535 = vclz %v534
  %v536 = vsub.s32 %v535, 2
  %vm537 = vcmp.gt.s32.totalorder 0, %v536
  %v538 = vsel %vm537, 0, %v536
  %v539 = vsub.s32 32, %v538
  %v540 = vshll.u32 %v531, %v538
  %v541 = vshrl.u32 %v523, %v539
  %v542 = vor.u32 %v540, %v541
  %v543 = vsub.s32 4294967266, %v538
  %v544 = vadd.s32 %v543, 127
  %v545 = vshll.u32 %v544, 23
  %v546 = vor.u32 4788187, %v545
  %v547 = vand.u32 2147483647, %v546
  %v549 = vcvt.s32.f32 %v542
  %v550 = vmul.f32 %v549, %v547
  %v551 = vxor.u32 %v550, 2147483648
  %v552 = vsel %vm469, %v551, %v550
  %v553 = vsub.s32 4, %v529
  %v554 = vsel %vm469, %v553, %v529
  %v555 = vsel %vm468, %v464, %v552
  %v556 = vsel %vm468, 0, %v554
  %v557 = vcosq.f32.pop %v555
  %v558 = vsinq.f32.pop %v555
  %vm559 = vweird.f32 %v464
  %v560 = vadd.s32 %v556, 3
  %v561 = vand.u32 %v560, 3
  %vm562 = vcmp.lt.s32.totalorder %v561, 2
  %vm563 = vcmp.eq.s32.totalorder %v561, 0
  %v564 = vxor.u32 %v558, 2147483648
  %v565 = vsel %vm563, %v557, %v564
  %vm566 = vcmp.eq.s32.totalorder %v561, 2
  %v567 = vxor.u32 %v557, 2147483648
  %v568 = vsel %vm566, %v567, %v558
  %v569 = vsel %vm562, %v565, %v568
  %v570 = vsel %vm559, nan, %v569
  %571 = vst [vmem:[%s2] sm:$0x3] %v570
  // Predicated region
  $region10: #{time_embedding.1} parent=0 // pred_check
    _
  $region11: #{time_embedding.1} parent=0 // pred_check_branch
    %573 = sbr.rel (0) target = $region13
  $region12: #{time_embedding.1} parent=0 // pred_region
    _
  $region13: #{time_embedding.1} parent=0 // pred_fallthru
    _
  // Predicated region
  $region14: #{time_embedding.1} parent=0 // pred_check
    _
  $region15: #{time_embedding.1} parent=0 // pred_check_branch
    %575 = sbr.rel (0) target = $region17
  $region16: #{time_embedding.1} parent=0 // pred_region
    _
  $region17: #{time_embedding.1} parent=0 // pred_fallthru
    _

</llo_original>
